<compile_context>
chip_gen: v5e
topology: v5e:2x2
jax: 0.10.0
libtpu: 0.0.40
codegen_flags: <defaults>
</compile_context>

<pallas_src>
import numpy as np
import jax
import jax.numpy as jnp
from jax.experimental import pallas as pl
from jax.experimental.pallas import tpu as pltpu

K = 7          # conv kernel size
PAD = K // 2   # padding = 3


def _pick_channel_tile(C, H, W, budget_bytes=4 << 20):
    """Largest divisor of C whose (TC, H, W) f32 block stays under budget."""
    target = max(1, budget_bytes // (H * W * 4))
    tc = min(C, target)
    while C % tc:
        tc -= 1
    return tc


def _conv_matrices(w, H, W):
    """Fold the zero-padded 7x7 conv over the (avg, max) map into matmuls.

    Returns:
      rsel: (K, H, H)   rsel[dy, i, r]   = 1  iff  r == i + dy - PAD
      band: (2K, W, W)  band[dy,   s, j] = w_avg[dy, s - j + PAD] (0 off-band)
                        band[K+dy, s, j] = w_max[dy, s - j + PAD]
    so that  conv2d(cat([avg, mx]), w, pad=3)  ==
        sum_dy  rsel[dy] @ (avg @ band[dy] + mx @ band[K + dy])
    The zero padding is implicit: out-of-range taps hit zero matrix entries.
    """
    wa = w[0, 0].astype(jnp.float32)                    # (K, K) "avg" channel
    wm = w[0, 1].astype(jnp.float32)                    # (K, K) "max" channel

    s = jnp.arange(W)[:, None]
    j = jnp.arange(W)[None, :]
    d = s - j + PAD                                     # (W, W) tap index dx
    valid = (d >= 0) & (d < K)
    dc = jnp.clip(d, 0, K - 1)
    ba = jnp.where(valid[None, :, :], wa[:, dc], 0.0)   # (K, W, W)
    bm = jnp.where(valid[None, :, :], wm[:, dc], 0.0)   # (K, W, W)
    band = jnp.concatenate([ba, bm], axis=0)            # (2K, W, W)

    i = jnp.arange(H)[:, None]
    r = jnp.arange(H)[None, :]
    dy = jnp.arange(K)[:, None, None]
    rsel = (r[None, :, :] == i[None, :, :] + dy - PAD).astype(jnp.float32)
    return rsel, band


def spatial_attention(x, w, channel_tile=None):
    """x: (N, C, H, W). w: (1, 2, K, K) conv weight (OIHW). Returns (N,1,H,W)."""
    N, C, H, W = x.shape
    if channel_tile is None:
        channel_tile = _pick_channel_tile(C, H, W)
    assert C % channel_tile == 0, "channel_tile must divide C"
    tc = channel_tile
    nc = C // tc
    inv_c = 1.0 / C

    rsel, band = _conv_matrices(w, H, W)

    def kernel(x_ref, band_ref, rsel_ref, o_ref, sum_ref, max_ref):
        c = pl.program_id(1)

        # Per-chunk channel reduction, accumulated in f32 scratch.
        xc = x_ref[0].astype(jnp.float32)      # (TC, H, W); no-op for f32 input
        csum = jnp.sum(xc, axis=0)             # (H, W)
        cmax = jnp.max(xc, axis=0)             # (H, W)

        @pl.when(c == 0)
        def _():
            sum_ref[...] = csum
            max_ref[...] = cmax

        @pl.when(c > 0)
        def _():
            sum_ref[...] = sum_ref[...] + csum
            max_ref[...] = jnp.maximum(max_ref[...], cmax)

        # Last channel chunk: 7x7 conv as 3*K small MXU matmuls, then sigmoid.
        @pl.when(c == pl.num_programs(1) - 1)
        def _():
            avg = sum_ref[...] * inv_c
            mx = max_ref[...]
            acc = jnp.zeros((H, W), jnp.float32)
            for dy in range(K):                # static unroll over 7 row taps
                t = jnp.dot(avg, band_ref[dy],
                            preferred_element_type=jnp.float32)
                t = t + jnp.dot(mx, band_ref[K + dy],
                                preferred_element_type=jnp.float32)
                acc = acc + jnp.dot(rsel_ref[dy], t,
                                    preferred_element_type=jnp.float32)
            o_ref[0, 0] = jax.nn.sigmoid(acc).astype(o_ref.dtype)

    return pl.pallas_call(
        kernel,
        out_shape=jax.ShapeDtypeStruct((N, 1, H, W), x.dtype),
        grid=(N, nc),
        in_specs=[
            pl.BlockSpec((1, tc, H, W), lambda n, c: (n, c, 0, 0)),
            pl.BlockSpec((2 * K, W, W), lambda n, c: (0, 0, 0)),
            pl.BlockSpec((K, H, H), lambda n, c: (0, 0, 0)),
        ],
        out_specs=pl.BlockSpec((1, 1, H, W), lambda n, c: (n, 0, 0, 0)),
        scratch_shapes=[
            pltpu.VMEM((H, W), jnp.float32),   # running channel sum
            pltpu.VMEM((H, W), jnp.float32),   # running channel max
        ],
        compiler_params=pltpu.CompilerParams(
            dimension_semantics=("parallel", "arbitrary")),
    )(x, band, rsel)


def reference(x, w):
    """Pure-JAX reference mirroring the PyTorch forward."""
    avg = jnp.mean(x, axis=1, keepdims=True)
    mx = jnp.max(x, axis=1, keepdims=True)
    cat = jnp.concatenate([avg, mx], axis=1)
    out = jax.lax.conv_general_dilated(
        cat, w.astype(cat.dtype), window_strides=(1, 1),
        padding=((PAD, PAD), (PAD, PAD)),
        dimension_numbers=("NCHW", "OIHW", "NCHW"))
    return jax.nn.sigmoid(out)


if __name__ == "__main__":
    key = jax.random.PRNGKey(0)
    kx, kw = jax.random.split(key)

    # Small shapes consistent with the module: NCHW input, Conv2d(2 -> 1, k=7).
    N, C, H, W = 2, 4, 16, 16
    x = jax.random.normal(kx, (N, C, H, W), dtype=jnp.float32)
    fan_in = 2 * K * K
    w = jax.random.normal(kw, (1, 2, K, K), dtype=jnp.float32) * (2.0 / fan_in) ** 0.5

    ref = jax.block_until_ready(reference(x, w))

    # Exercise both the single-chunk path (nc=1) and the multi-chunk
    # accumulator path (nc=2).  Tolerance sized for TPU MXU f32 matmul
    # (multi-bf16-pass) vs XLA's conv; structural errors would be >= 1e-2.
    for ct in (None, 2):
        out = jax.block_until_ready(spatial_attention(x, w, channel_tile=ct))
        if not np.allclose(np.asarray(out), np.asarray(ref), atol=2e-3, rtol=2e-3):
            err = float(np.max(np.abs(np.asarray(out) - np.asarray(ref))))
            raise AssertionError(
                f"Pallas kernel mismatch (channel_tile={ct}, max abs err={err})")

    print("KERNEL_OK")
</pallas_src>

<mosaic_0001>
module attributes {stable_mosaic.version = 11 : i64} {
  func.func @kernel(%arg0: i32, %arg1: i32, %arg2: memref<1x4x16x16xf32, #tpu.memory_space<vmem>>, %arg3: memref<14x16x16xf32, #tpu.memory_space<vmem>>, %arg4: memref<7x16x16xf32, #tpu.memory_space<vmem>>, %arg5: memref<1x1x16x16xf32, #tpu.memory_space<vmem>>, %arg6: memref<16x16xf32, #tpu.memory_space<vmem>>, %arg7: memref<16x16xf32, #tpu.memory_space<vmem>>) attributes {dimension_semantics = [#tpu.dimension_semantics<parallel>, #tpu.dimension_semantics<arbitrary>], iteration_bounds = array<i64: 2, 1>, scalar_prefetch = 0 : i64, scratch_operands = 2 : i64, tpu.core_type = #tpu.core_type<tc>, window_params = [{transform_indices = @transform_0, window_bounds = array<i64: 1, 4, 16, 16>}, {pipeline_mode = #tpu.pipeline_mode<synchronous>, transform_indices = @transform_1, window_bounds = array<i64: 14, 16, 16>}, {pipeline_mode = #tpu.pipeline_mode<synchronous>, transform_indices = @transform_2, window_bounds = array<i64: 7, 16, 16>}, {transform_indices = @transform_3, window_bounds = array<i64: 1, 1, 16, 16>}]} {
    %c0 = arith.constant 0 : index
    %c0_0 = arith.constant 0 : index
    %c0_1 = arith.constant 0 : index
    %c0_2 = arith.constant 0 : index
    %0 = vector.load %arg2[%c0, %c0_0, %c0_1, %c0_2] : memref<1x4x16x16xf32, #tpu.memory_space<vmem>>, vector<1x4x16x16xf32>
    %1 = vector.shape_cast %0 : vector<1x4x16x16xf32> to vector<4x16x16xf32>
    %cst = arith.constant dense<0.000000e+00> : vector<16x16xf32>
    %2 = vector.multi_reduction <add>, %1, %cst [0] : vector<4x16x16xf32> to vector<16x16xf32>
    %cst_3 = arith.constant dense<0xFF800000> : vector<16x16xf32>
    %3 = vector.multi_reduction <maximumf>, %1, %cst_3 [0] : vector<4x16x16xf32> to vector<16x16xf32>
    %c0_i32 = arith.constant 0 : i32
    %4 = arith.cmpi eq, %arg1, %c0_i32 : i32
    %5 = arith.extui %4 : i1 to i32
    %c0_i32_4 = arith.constant 0 : i32
    %6 = arith.cmpi ne, %5, %c0_i32_4 : i32
    scf.if %6 {
      %c0_9 = arith.constant 0 : index
      %c0_10 = arith.constant 0 : index
      %13 = vector.load %arg6[%c0_9, %c0_10] : memref<16x16xf32, #tpu.memory_space<vmem>>, vector<16x16xf32>
      tpu.vector_store %arg6[%c0_9, %c0_10], %2 {strides = array<i32>} : memref<16x16xf32, #tpu.memory_space<vmem>>, vector<16x16xf32>,
      %c0_11 = arith.constant 0 : index
      %c0_12 = arith.constant 0 : index
      %14 = vector.load %arg7[%c0_11, %c0_12] : memref<16x16xf32, #tpu.memory_space<vmem>>, vector<16x16xf32>
      tpu.vector_store %arg7[%c0_11, %c0_12], %3 {strides = array<i32>} : memref<16x16xf32, #tpu.memory_space<vmem>>, vector<16x16xf32>,
    } else {
    }
    %c0_i32_5 = arith.constant 0 : i32
    %7 = arith.cmpi sgt, %arg1, %c0_i32_5 : i32
    %8 = arith.extui %7 : i1 to i32
    %c0_i32_6 = arith.constant 0 : i32
    %9 = arith.cmpi ne, %8, %c0_i32_6 : i32
    scf.if %9 {
      %c0_9 = arith.constant 0 : index
      %c0_10 = arith.constant 0 : index
      %13 = vector.load %arg6[%c0_9, %c0_10] : memref<16x16xf32, #tpu.memory_space<vmem>>, vector<16x16xf32>
      %14 = arith.addf %13, %2 : vector<16x16xf32>
      %c0_11 = arith.constant 0 : index
      %c0_12 = arith.constant 0 : index
      %15 = vector.load %arg6[%c0_11, %c0_12] : memref<16x16xf32, #tpu.memory_space<vmem>>, vector<16x16xf32>
      tpu.vector_store %arg6[%c0_11, %c0_12], %14 {strides = array<i32>} : memref<16x16xf32, #tpu.memory_space<vmem>>, vector<16x16xf32>,
      %c0_13 = arith.constant 0 : index
      %c0_14 = arith.constant 0 : index
      %16 = vector.load %arg7[%c0_13, %c0_14] : memref<16x16xf32, #tpu.memory_space<vmem>>, vector<16x16xf32>
      %17 = arith.maximumf %16, %3 : vector<16x16xf32>
      %c0_15 = arith.constant 0 : index
      %c0_16 = arith.constant 0 : index
      %18 = vector.load %arg7[%c0_15, %c0_16] : memref<16x16xf32, #tpu.memory_space<vmem>>, vector<16x16xf32>
      tpu.vector_store %arg7[%c0_15, %c0_16], %17 {strides = array<i32>} : memref<16x16xf32, #tpu.memory_space<vmem>>, vector<16x16xf32>,
    } else {
    }
    %c0_i32_7 = arith.constant 0 : i32
    %10 = arith.cmpi eq, %arg1, %c0_i32_7 : i32
    %11 = arith.extui %10 : i1 to i32
    %c0_i32_8 = arith.constant 0 : i32
    %12 = arith.cmpi ne, %11, %c0_i32_8 : i32
    scf.if %12 {
      %c0_9 = arith.constant 0 : index
      %c0_10 = arith.constant 0 : index
      %13 = vector.load %arg6[%c0_9, %c0_10] : memref<16x16xf32, #tpu.memory_space<vmem>>, vector<16x16xf32>
      %cst_11 = arith.constant 2.500000e-01 : f32
      %14 = vector.broadcast %cst_11 : f32 to vector<16x16xf32>
      %15 = arith.mulf %13, %14 : vector<16x16xf32>
      %c0_12 = arith.constant 0 : index
      %c0_13 = arith.constant 0 : index
      %16 = vector.load %arg7[%c0_12, %c0_13] : memref<16x16xf32, #tpu.memory_space<vmem>>, vector<16x16xf32>
      %cst_14 = arith.constant 0.000000e+00 : f32
      %17 = vector.broadcast %cst_14 : f32 to vector<16x16xf32>
      %c0_15 = arith.constant 0 : index
      %c0_16 = arith.constant 0 : index
      %c0_17 = arith.constant 0 : index
      %18 = vector.load %arg3[%c0_15, %c0_16, %c0_17] : memref<14x16x16xf32, #tpu.memory_space<vmem>>, vector<1x16x16xf32>
      %19 = vector.shape_cast %18 : vector<1x16x16xf32> to vector<16x16xf32>
      %cst_18 = arith.constant dense<0.000000e+00> : vector<16x16xf32>
      %20 = tpu.matmul %15, %19, %cst_18 {dimension_numbers = #tpu.dot_dimension_numbers<[1], [0], [0], [1], [0, 0, 1, 1], [], []>} : vector<16x16xf32>, vector<16x16xf32>, vector<16x16xf32> -> vector<16x16xf32>
      %c7 = arith.constant 7 : index
      %c0_19 = arith.constant 0 : index
      %c0_20 = arith.constant 0 : index
      %21 = vector.load %arg3[%c7, %c0_19, %c0_20] : memref<14x16x16xf32, #tpu.memory_space<vmem>>, vector<1x16x16xf32>
      %22 = vector.shape_cast %21 : vector<1x16x16xf32> to vector<16x16xf32>
      %cst_21 = arith.constant dense<0.000000e+00> : vector<16x16xf32>
      %23 = tpu.matmul %16, %22, %cst_21 {dimension_numbers = #tpu.dot_dimension_numbers<[1], [0], [0], [1], [0, 0, 1, 1], [], []>} : vector<16x16xf32>, vector<16x16xf32>, vector<16x16xf32> -> vector<16x16xf32>
      %24 = arith.addf %20, %23 : vector<16x16xf32>
      %c0_22 = arith.constant 0 : index
      %c0_23 = arith.constant 0 : index
      %c0_24 = arith.constant 0 : index
      %25 = vector.load %arg4[%c0_22, %c0_23, %c0_24] : memref<7x16x16xf32, #tpu.memory_space<vmem>>, vector<1x16x16xf32>
      %26 = vector.shape_cast %25 : vector<1x16x16xf32> to vector<16x16xf32>
      %cst_25 = arith.constant dense<0.000000e+00> : vector<16x16xf32>
      %27 = tpu.matmul %26, %24, %cst_25 {dimension_numbers = #tpu.dot_dimension_numbers<[1], [0], [0], [1], [0, 0, 1, 1], [], []>} : vector<16x16xf32>, vector<16x16xf32>, vector<16x16xf32> -> vector<16x16xf32>
      %28 = arith.addf %17, %27 : vector<16x16xf32>
      %c1 = arith.constant 1 : index
      %c0_26 = arith.constant 0 : index
      %c0_27 = arith.constant 0 : index
      %29 = vector.load %arg3[%c1, %c0_26, %c0_27] : memref<14x16x16xf32, #tpu.memory_space<vmem>>, vector<1x16x16xf32>
      %30 = vector.shape_cast %29 : vector<1x16x16xf32> to vector<16x16xf32>
      %cst_28 = arith.constant dense<0.000000e+00> : vector<16x16xf32>
      %31 = tpu.matmul %15, %30, %cst_28 {dimension_numbers = #tpu.dot_dimension_numbers<[1], [0], [0], [1], [0, 0, 1, 1], [], []>} : vector<16x16xf32>, vector<16x16xf32>, vector<16x16xf32> -> vector<16x16xf32>
      %c8 = arith.constant 8 : index
      %c0_29 = arith.constant 0 : index
      %c0_30 = arith.constant 0 : index
      %32 = vector.load %arg3[%c8, %c0_29, %c0_30] : memref<14x16x16xf32, #tpu.memory_space<vmem>>, vector<1x16x16xf32>
      %33 = vector.shape_cast %32 : vector<1x16x16xf32> to vector<16x16xf32>
      %cst_31 = arith.constant dense<0.000000e+00> : vector<16x16xf32>
      %34 = tpu.matmul %16, %33, %cst_31 {dimension_numbers = #tpu.dot_dimension_numbers<[1], [0], [0], [1], [0, 0, 1, 1], [], []>} : vector<16x16xf32>, vector<16x16xf32>, vector<16x16xf32> -> vector<16x16xf32>
      %35 = arith.addf %31, %34 : vector<16x16xf32>
      %c1_32 = arith.constant 1 : index
      %c0_33 = arith.constant 0 : index
      %c0_34 = arith.constant 0 : index
      %36 = vector.load %arg4[%c1_32, %c0_33, %c0_34] : memref<7x16x16xf32, #tpu.memory_space<vmem>>, vector<1x16x16xf32>
      %37 = vector.shape_cast %36 : vector<1x16x16xf32> to vector<16x16xf32>
      %cst_35 = arith.constant dense<0.000000e+00> : vector<16x16xf32>
      %38 = tpu.matmul %37, %35, %cst_35 {dimension_numbers = #tpu.dot_dimension_numbers<[1], [0], [0], [1], [0, 0, 1, 1], [], []>} : vector<16x16xf32>, vector<16x16xf32>, vector<16x16xf32> -> vector<16x16xf32>
      %39 = arith.addf %28, %38 : vector<16x16xf32>
      %c2 = arith.constant 2 : index
      %c0_36 = arith.constant 0 : index
      %c0_37 = arith.constant 0 : index
      %40 = vector.load %arg3[%c2, %c0_36, %c0_37] : memref<14x16x16xf32, #tpu.memory_space<vmem>>, vector<1x16x16xf32>
      %41 = vector.shape_cast %40 : vector<1x16x16xf32> to vector<16x16xf32>
      %cst_38 = arith.constant dense<0.000000e+00> : vector<16x16xf32>
      %42 = tpu.matmul %15, %41, %cst_38 {dimension_numbers = #tpu.dot_dimension_numbers<[1], [0], [0], [1], [0, 0, 1, 1], [], []>} : vector<16x16xf32>, vector<16x16xf32>, vector<16x16xf32> -> vector<16x16xf32>
      %c9 = arith.constant 9 : index
      %c0_39 = arith.constant 0 : index
      %c0_40 = arith.constant 0 : index
      %43 = vector.load %arg3[%c9, %c0_39, %c0_40] : memref<14x16x16xf32, #tpu.memory_space<vmem>>, vector<1x16x16xf32>
      %44 = vector.shape_cast %43 : vector<1x16x16xf32> to vector<16x16xf32>
      %cst_41 = arith.constant dense<0.000000e+00> : vector<16x16xf32>
      %45 = tpu.matmul %16, %44, %cst_41 {dimension_numbers = #tpu.dot_dimension_numbers<[1], [0], [0], [1], [0, 0, 1, 1], [], []>} : vector<16x16xf32>, vector<16x16xf32>, vector<16x16xf32> -> vector<16x16xf32>
      %46 = arith.addf %42, %45 : vector<16x16xf32>
      %c2_42 = arith.constant 2 : index
      %c0_43 = arith.constant 0 : index
      %c0_44 = arith.constant 0 : index
      %47 = vector.load %arg4[%c2_42, %c0_43, %c0_44] : memref<7x16x16xf32, #tpu.memory_space<vmem>>, vector<1x16x16xf32>
      %48 = vector.shape_cast %47 : vector<1x16x16xf32> to vector<16x16xf32>
      %cst_45 = arith.constant dense<0.000000e+00> : vector<16x16xf32>
      %49 = tpu.matmul %48, %46, %cst_45 {dimension_numbers = #tpu.dot_dimension_numbers<[1], [0], [0], [1], [0, 0, 1, 1], [], []>} : vector<16x16xf32>, vector<16x16xf32>, vector<16x16xf32> -> vector<16x16xf32>
      %50 = arith.addf %39, %49 : vector<16x16xf32>
      %c3 = arith.constant 3 : index
      %c0_46 = arith.constant 0 : index
      %c0_47 = arith.constant 0 : index
      %51 = vector.load %arg3[%c3, %c0_46, %c0_47] : memref<14x16x16xf32, #tpu.memory_space<vmem>>, vector<1x16x16xf32>
      %52 = vector.shape_cast %51 : vector<1x16x16xf32> to vector<16x16xf32>
      %cst_48 = arith.constant dense<0.000000e+00> : vector<16x16xf32>
      %53 = tpu.matmul %15, %52, %cst_48 {dimension_numbers = #tpu.dot_dimension_numbers<[1], [0], [0], [1], [0, 0, 1, 1], [], []>} : vector<16x16xf32>, vector<16x16xf32>, vector<16x16xf32> -> vector<16x16xf32>
      %c10 = arith.constant 10 : index
      %c0_49 = arith.constant 0 : index
      %c0_50 = arith.constant 0 : index
      %54 = vector.load %arg3[%c10, %c0_49, %c0_50] : memref<14x16x16xf32, #tpu.memory_space<vmem>>, vector<1x16x16xf32>
      %55 = vector.shape_cast %54 : vector<1x16x16xf32> to vector<16x16xf32>
      %cst_51 = arith.constant dense<0.000000e+00> : vector<16x16xf32>
      %56 = tpu.matmul %16, %55, %cst_51 {dimension_numbers = #tpu.dot_dimension_numbers<[1], [0], [0], [1], [0, 0, 1, 1], [], []>} : vector<16x16xf32>, vector<16x16xf32>, vector<16x16xf32> -> vector<16x16xf32>
      %57 = arith.addf %53, %56 : vector<16x16xf32>
      %c3_52 = arith.constant 3 : index
      %c0_53 = arith.constant 0 : index
      %c0_54 = arith.constant 0 : index
      %58 = vector.load %arg4[%c3_52, %c0_53, %c0_54] : memref<7x16x16xf32, #tpu.memory_space<vmem>>, vector<1x16x16xf32>
      %59 = vector.shape_cast %58 : vector<1x16x16xf32> to vector<16x16xf32>
      %cst_55 = arith.constant dense<0.000000e+00> : vector<16x16xf32>
      %60 = tpu.matmul %59, %57, %cst_55 {dimension_numbers = #tpu.dot_dimension_numbers<[1], [0], [0], [1], [0, 0, 1, 1], [], []>} : vector<16x16xf32>, vector<16x16xf32>, vector<16x16xf32> -> vector<16x16xf32>
      %61 = arith.addf %50, %60 : vector<16x16xf32>
      %c4 = arith.constant 4 : index
      %c0_56 = arith.constant 0 : index
      %c0_57 = arith.constant 0 : index
      %62 = vector.load %arg3[%c4, %c0_56, %c0_57] : memref<14x16x16xf32, #tpu.memory_space<vmem>>, vector<1x16x16xf32>
      %63 = vector.shape_cast %62 : vector<1x16x16xf32> to vector<16x16xf32>
      %cst_58 = arith.constant dense<0.000000e+00> : vector<16x16xf32>
      %64 = tpu.matmul %15, %63, %cst_58 {dimension_numbers = #tpu.dot_dimension_numbers<[1], [0], [0], [1], [0, 0, 1, 1], [], []>} : vector<16x16xf32>, vector<16x16xf32>, vector<16x16xf32> -> vector<16x16xf32>
      %c11 = arith.constant 11 : index
      %c0_59 = arith.constant 0 : index
      %c0_60 = arith.constant 0 : index
      %65 = vector.load %arg3[%c11, %c0_59, %c0_60] : memref<14x16x16xf32, #tpu.memory_space<vmem>>, vector<1x16x16xf32>
      %66 = vector.shape_cast %65 : vector<1x16x16xf32> to vector<16x16xf32>
      %cst_61 = arith.constant dense<0.000000e+00> : vector<16x16xf32>
      %67 = tpu.matmul %16, %66, %cst_61 {dimension_numbers = #tpu.dot_dimension_numbers<[1], [0], [0], [1], [0, 0, 1, 1], [], []>} : vector<16x16xf32>, vector<16x16xf32>, vector<16x16xf32> -> vector<16x16xf32>
      %68 = arith.addf %64, %67 : vector<16x16xf32>
      %c4_62 = arith.constant 4 : index
      %c0_63 = arith.constant 0 : index
      %c0_64 = arith.constant 0 : index
      %69 = vector.load %arg4[%c4_62, %c0_63, %c0_64] : memref<7x16x16xf32, #tpu.memory_space<vmem>>, vector<1x16x16xf32>
      %70 = vector.shape_cast %69 : vector<1x16x16xf32> to vector<16x16xf32>
      %cst_65 = arith.constant dense<0.000000e+00> : vector<16x16xf32>
      %71 = tpu.matmul %70, %68, %cst_65 {dimension_numbers = #tpu.dot_dimension_numbers<[1], [0], [0], [1], [0, 0, 1, 1], [], []>} : vector<16x16xf32>, vector<16x16xf32>, vector<16x16xf32> -> vector<16x16xf32>
      %72 = arith.addf %61, %71 : vector<16x16xf32>
      %c5 = arith.constant 5 : index
      %c0_66 = arith.constant 0 : index
      %c0_67 = arith.constant 0 : index
      %73 = vector.load %arg3[%c5, %c0_66, %c0_67] : memref<14x16x16xf32, #tpu.memory_space<vmem>>, vector<1x16x16xf32>
      %74 = vector.shape_cast %73 : vector<1x16x16xf32> to vector<16x16xf32>
      %cst_68 = arith.constant dense<0.000000e+00> : vector<16x16xf32>
      %75 = tpu.matmul %15, %74, %cst_68 {dimension_numbers = #tpu.dot_dimension_numbers<[1], [0], [0], [1], [0, 0, 1, 1], [], []>} : vector<16x16xf32>, vector<16x16xf32>, vector<16x16xf32> -> vector<16x16xf32>
      %c12 = arith.constant 12 : index
      %c0_69 = arith.constant 0 : index
      %c0_70 = arith.constant 0 : index
      %76 = vector.load %arg3[%c12, %c0_69, %c0_70] : memref<14x16x16xf32, #tpu.memory_space<vmem>>, vector<1x16x16xf32>
      %77 = vector.shape_cast %76 : vector<1x16x16xf32> to vector<16x16xf32>
      %cst_71 = arith.constant dense<0.000000e+00> : vector<16x16xf32>
      %78 = tpu.matmul %16, %77, %cst_71 {dimension_numbers = #tpu.dot_dimension_numbers<[1], [0], [0], [1], [0, 0, 1, 1], [], []>} : vector<16x16xf32>, vector<16x16xf32>, vector<16x16xf32> -> vector<16x16xf32>
      %79 = arith.addf %75, %78 : vector<16x16xf32>
      %c5_72 = arith.constant 5 : index
      %c0_73 = arith.constant 0 : index
      %c0_74 = arith.constant 0 : index
      %80 = vector.load %arg4[%c5_72, %c0_73, %c0_74] : memref<7x16x16xf32, #tpu.memory_space<vmem>>, vector<1x16x16xf32>
      %81 = vector.shape_cast %80 : vector<1x16x16xf32> to vector<16x16xf32>
      %cst_75 = arith.constant dense<0.000000e+00> : vector<16x16xf32>
      %82 = tpu.matmul %81, %79, %cst_75 {dimension_numbers = #tpu.dot_dimension_numbers<[1], [0], [0], [1], [0, 0, 1, 1], [], []>} : vector<16x16xf32>, vector<16x16xf32>, vector<16x16xf32> -> vector<16x16xf32>
      %83 = arith.addf %72, %82 : vector<16x16xf32>
      %c6 = arith.constant 6 : index
      %c0_76 = arith.constant 0 : index
      %c0_77 = arith.constant 0 : index
      %84 = vector.load %arg3[%c6, %c0_76, %c0_77] : memref<14x16x16xf32, #tpu.memory_space<vmem>>, vector<1x16x16xf32>
      %85 = vector.shape_cast %84 : vector<1x16x16xf32> to vector<16x16xf32>
      %cst_78 = arith.constant dense<0.000000e+00> : vector<16x16xf32>
      %86 = tpu.matmul %15, %85, %cst_78 {dimension_numbers = #tpu.dot_dimension_numbers<[1], [0], [0], [1], [0, 0, 1, 1], [], []>} : vector<16x16xf32>, vector<16x16xf32>, vector<16x16xf32> -> vector<16x16xf32>
      %c13 = arith.constant 13 : index
      %c0_79 = arith.constant 0 : index
      %c0_80 = arith.constant 0 : index
      %87 = vector.load %arg3[%c13, %c0_79, %c0_80] : memref<14x16x16xf32, #tpu.memory_space<vmem>>, vector<1x16x16xf32>
      %88 = vector.shape_cast %87 : vector<1x16x16xf32> to vector<16x16xf32>
      %cst_81 = arith.constant dense<0.000000e+00> : vector<16x16xf32>
      %89 = tpu.matmul %16, %88, %cst_81 {dimension_numbers = #tpu.dot_dimension_numbers<[1], [0], [0], [1], [0, 0, 1, 1], [], []>} : vector<16x16xf32>, vector<16x16xf32>, vector<16x16xf32> -> vector<16x16xf32>
      %90 = arith.addf %86, %89 : vector<16x16xf32>
      %c6_82 = arith.constant 6 : index
      %c0_83 = arith.constant 0 : index
      %c0_84 = arith.constant 0 : index
      %91 = vector.load %arg4[%c6_82, %c0_83, %c0_84] : memref<7x16x16xf32, #tpu.memory_space<vmem>>, vector<1x16x16xf32>
      %92 = vector.shape_cast %91 : vector<1x16x16xf32> to vector<16x16xf32>
      %cst_85 = arith.constant dense<0.000000e+00> : vector<16x16xf32>
      %93 = tpu.matmul %92, %90, %cst_85 {dimension_numbers = #tpu.dot_dimension_numbers<[1], [0], [0], [1], [0, 0, 1, 1], [], []>} : vector<16x16xf32>, vector<16x16xf32>, vector<16x16xf32> -> vector<16x16xf32>
      %94 = arith.addf %83, %93 : vector<16x16xf32>
      %95 = arith.negf %94 : vector<16x16xf32>
      %96 = math.exp %95 : vector<16x16xf32>
      %cst_86 = arith.constant 1.000000e+00 : f32
      %97 = vector.broadcast %cst_86 : f32 to vector<16x16xf32>
      %98 = arith.addf %97, %96 : vector<16x16xf32>
      %99 = arith.divf %97, %98 : vector<16x16xf32>
      %c0_87 = arith.constant 0 : index
      %c0_88 = arith.constant 0 : index
      %c0_89 = arith.constant 0 : index
      %c0_90 = arith.constant 0 : index
      %100 = vector.load %arg5[%c0_87, %c0_88, %c0_89, %c0_90] : memref<1x1x16x16xf32, #tpu.memory_space<vmem>>, vector<1x1x16x16xf32>
      %101 = vector.shape_cast %100 : vector<1x1x16x16xf32> to vector<16x16xf32>
      %102 = vector.shape_cast %99 : vector<16x16xf32> to vector<1x1x16x16xf32>
      tpu.vector_store %arg5[%c0_87, %c0_88, %c0_89, %c0_90], %102 {strides = array<i32>} : memref<1x1x16x16xf32, #tpu.memory_space<vmem>>, vector<1x1x16x16xf32>,
    } else {
    }
    return
  }
  func.func @transform_0(%arg0: i32, %arg1: i32) -> (i32, i32, i32, i32) {
    %c0_i32 = arith.constant 0 : i32
    %c0_i32_0 = arith.constant 0 : i32
    %c0_i32_1 = arith.constant 0 : i32
    return %arg0, %arg1, %c0_i32, %c0_i32_0 : i32, i32, i32, i32
  }
  func.func @transform_1(%arg0: i32, %arg1: i32) -> (i32, i32, i32) {
    %c0_i32 = arith.constant 0 : i32
    %c0_i32_0 = arith.constant 0 : i32
    %c0_i32_1 = arith.constant 0 : i32
    %c0_i32_2 = arith.constant 0 : i32
    return %c0_i32, %c0_i32_0, %c0_i32_1 : i32, i32, i32
  }
  func.func @transform_2(%arg0: i32, %arg1: i32) -> (i32, i32, i32) {
    %c0_i32 = arith.constant 0 : i32
    %c0_i32_0 = arith.constant 0 : i32
    %c0_i32_1 = arith.constant 0 : i32
    %c0_i32_2 = arith.constant 0 : i32
    return %c0_i32, %c0_i32_0, %c0_i32_1 : i32, i32, i32
  }
  func.func @transform_3(%arg0: i32, %arg1: i32) -> (i32, i32, i32, i32) {
    %c0_i32 = arith.constant 0 : i32
    %c0_i32_0 = arith.constant 0 : i32
    %c0_i32_1 = arith.constant 0 : i32
    %c0_i32_2 = arith.constant 0 : i32
    return %arg0, %c0_i32, %c0_i32_0, %c0_i32_1 : i32, i32, i32, i32
  }
}

</mosaic_0001>

<llo_original>
// kernel: tpu_custom_call.1
$region0: #{tpu_custom_call.1}
  #allocation0 [shape = 'u32[]', space=smem, size = 0x4, offset = 0x4, fixed_abs, tag = 'smem constant byte address 0x4 - core index']
  #allocation1 [shape = 'u32[72,128]{1,0:T(1,128)}', space=vmem, size = 0x9000, scoped, tag = 'internal scratch']
  #allocation2 [shape = 'f32[16,16]{1,0:T(8,128)}', space=vmem, size = 0x2000, scoped, tag = 'scratch operand']
  #allocation3 [shape = 'f32[16,16]{1,0:T(8,128)}', space=vmem, size = 0x2000, scoped, tag = 'scratch operand']
  %s0 = inlined_call_operand.hbm [shape: f32[2,4,16,16], index: 0, kind: input, shape index: {}]
  %s1 = inlined_call_operand.hbm [shape: f32[14,16,16], index: 1, kind: input, shape index: {}]
  %s2 = inlined_call_operand.hbm [shape: f32[7,16,16], index: 2, kind: input, shape index: {}]
  %s3 = inlined_call_operand.hbm [shape: f32[2,1,16,16], index: 3, kind: output, shape index: {}]
  %s4 = sld [smem:[#allocation0]]
  $region69: #{tpu_custom_call.1} parent=0
    _
  %s6 = ssub.s32 1, %s4
  %s7 = scalar_select 0, %s6, %s4
  $region1: #{tpu_custom_call.1} parent=0
    #allocation4 [shape = 'u8[65536]{0}', space=vmem, size = 0x10000, scoped, tag = 'input window, operand 0']
    #allocation5 [shape = 's32[2]{0}', space=sflag, size = 0x8, scoped, tag = 'scoped memory for tpu_custom_call.1']
    #allocation6 [shape = 's32[2]{0}', space=sflag, size = 0x8, scoped, tag = 'scoped memory for tpu_custom_call.1']
    #allocation7 [shape = 'u8[114688]{0}', space=vmem, size = 0x1c000, scoped, tag = 'input window, operand 1, single buffered']
    #allocation8 [shape = 's32[1]{0}', space=sflag, size = 0x4, scoped, tag = 'scoped memory for tpu_custom_call.1']
    #allocation9 [shape = 'u8[57344]{0}', space=vmem, size = 0xe000, scoped, tag = 'input window, operand 2, single buffered']
    #allocation10 [shape = 'u8[16384]{0}', space=vmem, size = 0x4000, scoped, tag = 'output window, operand 0']
    %8 = vsyncpa [#allocation5], 0
    %s9 = scalar_lea.sflag [#allocation5], 1
    %10 = vsyncpa %s9, 0
    %11 = vsyncpa [#allocation8], 0
    %12 = vsyncpa [#allocation6], 0
    %s13 = scalar_lea.sflag [#allocation6], 1
    %14 = vsyncpa %s13, 0
    loop: start=0, step=1, limit=4
    $region2: #{tpu_custom_call.1} parent=1 // loop_pre_header
      _
    $region3: #{tpu_custom_call.1} parent=1 // loop_header
      %s16 = sphi 0, %s20
      %p17 = scmp.ge.s32.totalorder %s16, 4
      %s23 = sphi 0, %s35
      %s24 = sphi 0, %s31
      %s25 = sphi 0, %s23
      %s26 = sphi 0, %s24
      %s27 = sphi 0, %s25
      %s28 = sphi 0, %s26
      %s40 = sphi 0, %s42
      %s43 = sphi 0, %s40
      %s44 = sphi 0, %s43
      %s60 = sphi 0, %s44
      %s64 = sphi 0, %s64
      %s66 = sphi 0, %s64
      %s67 = sphi 0, %s66
      %s81 = sphi 0, %s67
      %s85 = sphi 0, %s85
      %s87 = sphi 0, %s85
      %s88 = sphi 0, %s87
      %s102 = sphi 0, %s88
      %s108 = sphi 0, %s110
      %s111 = sphi 0, %s108
      %s112 = sphi 0, %s111
      %s128 = sphi 0, %s112
    $region4: #{tpu_custom_call.1} parent=1 // loop_header_branch
      %19 = sbr.rel (%p17) target = $region8
    $region5: #{tpu_custom_call.1} parent=1 // loop_body
      %s21 = ssub.s32 %s16, 1
      %s22 = ssub.s32 %s16, 2
      %s29 = sadd.s32 1, %s24
      %p30 = scmp.ge.s32.totalorder %s29, 1
      %s31 = scalar_select %p30, 0, %s29
      %s32 = sadd.s32 1, %s23
      %s33 = scalar_select %p30, %s32, %s23
      %p34 = scmp.ge.s32.totalorder %s33, 2
      %s35 = scalar_select %p34, 0, %s33
      %s36 = ssub.s32 %s23, %s35
      %s37 = ssub.s32 %s24, %s31
      %s38 = sor.u32 %s36, %s37
      %p39 = scmp.eq.s32.totalorder %s38, 0
      %s41 = sadd.s32 %s40, 1
      %s42 = scalar_select %p39, %s40, %s41
      %p45 = pneg %p39
      %p46 = scmp.eq.s32.totalorder %s16, 1
      %p47 = por %p45, %p46
      %p48 = scmp.ne.s32.totalorder %s40, %s43
      %p49 = scmp.eq.s32.totalorder %s16, 0
      %p50 = por %p48, %p49
      %p51 = scmp.ne.s32.totalorder %s40, %s43
      %p52 = scmp.eq.s32.totalorder %s21, 1
      %p53 = por %p51, %p52
      %p54 = scmp.ne.s32.totalorder %s43, %s44
      %p55 = scmp.eq.s32.totalorder %s21, 0
      %p56 = por %p54, %p55
      %p57 = scmp.ne.s32.totalorder %s43, %s44
      %p58 = scmp.eq.s32.totalorder %s22, 1
      %p59 = por %p57, %p58
      %p61 = scmp.ne.s32.totalorder %s44, %s60
      %p62 = scmp.eq.s32.totalorder %s22, 0
      %p63 = por %p61, %p62
      %s65 = sadd.s32 %s64, 1
      %p68 = scmp.eq.s32.totalorder %s16, 1
      %p69 = scmp.ne.s32.totalorder %s64, %s66
      %p70 = scmp.eq.s32.totalorder %s16, 0
      %p71 = por %p69, %p70
      %p72 = scmp.ne.s32.totalorder %s64, %s66
      %p73 = scmp.eq.s32.totalorder %s21, 1
      %p74 = por %p72, %p73
      %p75 = scmp.ne.s32.totalorder %s66, %s67
      %p76 = scmp.eq.s32.totalorder %s21, 0
      %p77 = por %p75, %p76
      %p78 = scmp.ne.s32.totalorder %s66, %s67
      %p79 = scmp.eq.s32.totalorder %s22, 1
      %p80 = por %p78, %p79
      %p82 = scmp.ne.s32.totalorder %s67, %s81
      %p83 = scmp.eq.s32.totalorder %s22, 0
      %p84 = por %p82, %p83
      %s86 = sadd.s32 %s85, 1
      %p89 = scmp.eq.s32.totalorder %s16, 1
      %p90 = scmp.ne.s32.totalorder %s85, %s87
      %p91 = scmp.eq.s32.totalorder %s16, 0
      %p92 = por %p90, %p91
      %p93 = scmp.ne.s32.totalorder %s85, %s87
      %p94 = scmp.eq.s32.totalorder %s21, 1
      %p95 = por %p93, %p94
      %p96 = scmp.ne.s32.totalorder %s87, %s88
      %p97 = scmp.eq.s32.totalorder %s21, 0
      %p98 = por %p96, %p97
      %p99 = scmp.ne.s32.totalorder %s87, %s88
      %p100 = scmp.eq.s32.totalorder %s22, 1
      %p101 = por %p99, %p100
      %p103 = scmp.ne.s32.totalorder %s88, %s102
      %p104 = scmp.eq.s32.totalorder %s22, 0
      %p105 = por %p103, %p104
      %s106 = ssub.s32 %s23, %s35
      %p107 = scmp.eq.s32.totalorder %s106, 0
      %s109 = sadd.s32 %s108, 1
      %s110 = scalar_select %p107, %s108, %s109
      %p113 = pneg %p107
      %p114 = scmp.eq.s32.totalorder %s16, 1
      %p115 = por %p113, %p114
      %p116 = scmp.ne.s32.totalorder %s108, %s111
      %p117 = scmp.eq.s32.totalorder %s16, 0
      %p118 = por %p116, %p117
      %p119 = scmp.ne.s32.totalorder %s108, %s111
      %p120 = scmp.eq.s32.totalorder %s21, 1
      %p121 = por %p119, %p120
      %p122 = scmp.ne.s32.totalorder %s111, %s112
      %p123 = scmp.eq.s32.totalorder %s21, 0
      %p124 = por %p122, %p123
      %p125 = scmp.ne.s32.totalorder %s111, %s112
      %p126 = scmp.eq.s32.totalorder %s22, 1
      %p127 = por %p125, %p126
      %p129 = scmp.ne.s32.totalorder %s112, %s128
      %p130 = scmp.eq.s32.totalorder %s22, 0
      %p131 = por %p129, %p130
      %p132 = scmp.le.s32.totalorder 1, %s16
      %p133 = scmp.lt.s32.totalorder %s16, 3
      %p134 = pnand %p132, %p133
      %p135 = pneg %p134
      // Predicated region
      $region9: #{tpu_custom_call.1} parent=5 // pred_check
        _
      $region10: #{tpu_custom_call.1} parent=5 // pred_check_branch
        %137 = sbr.rel (%p134) target = $region12
      $region11: #{tpu_custom_call.1} parent=5 // pred_region
        %s138 = ssub.s32 %s16, 1
        // Predicated region
        $region13: #{tpu_custom_call.1} parent=11 // pred_check
          %p139 = pneg %p77
        $region14: #{tpu_custom_call.1} parent=11 // pred_check_branch
          %141 = sbr.rel (%p139) target = $region16
        $region15: #{tpu_custom_call.1} parent=11 // pred_region
          %143 = vsyncadd [#allocation8], 0
          %s144 = sshll.u32 %s1, 4
          %s145 = int_to_ptr.hbm [resolvable:$true] %s144
          %s146 = sshll.u32 [#allocation7], 4
          %s147 = int_to_ptr.vmem [resolvable:$true] %s146
          %152 = dma.hbm_to_vmem [thread:$0]  %s145, 3584, %s147, [#allocation8], 128, 128, 8
        $region16: #{tpu_custom_call.1} parent=11 // pred_fallthru
          _
        // Predicated region
        $region17: #{tpu_custom_call.1} parent=11 // pred_check
          %p153 = pneg %p98
        $region18: #{tpu_custom_call.1} parent=11 // pred_check_branch
          %155 = sbr.rel (%p153) target = $region20
        $region19: #{tpu_custom_call.1} parent=11 // pred_region
          %157 = vsyncadd [#allocation8], 0
          %s158 = sshll.u32 %s2, 4
          %s159 = int_to_ptr.hbm [resolvable:$true] %s158
          %s160 = sshll.u32 [#allocation9], 4
          %s161 = int_to_ptr.vmem [resolvable:$true] %s160
          %166 = dma.hbm_to_vmem [thread:$0]  %s159, 1792, %s161, [#allocation8], 128, 128, 8
        $region20: #{tpu_custom_call.1} parent=11 // pred_fallthru
          _
      $region12: #{tpu_custom_call.1} parent=5 // pred_fallthru
        _
      %p167 = scmp.lt.s32.totalorder %s16, 2
      // Predicated region
      $region21: #{tpu_custom_call.1} parent=5 // pred_check
        %p168 = pneg %p167
      $region22: #{tpu_custom_call.1} parent=5 // pred_check_branch
        %170 = sbr.rel (%p168) target = $region24
      $region23: #{tpu_custom_call.1} parent=5 // pred_region
        // Predicated region
        $region25: #{tpu_custom_call.1} parent=23 // pred_check
          %p171 = pneg %p50
        $region26: #{tpu_custom_call.1} parent=23 // pred_check_branch
          %173 = sbr.rel (%p171) target = $region28
        $region27: #{tpu_custom_call.1} parent=23 // pred_region
          %s174 = sand.u32 %s40, 1
          %s175 = scalar_lea.sflag [#allocation5], %s174
          %s176 = sand.u32 %s40, 1
          %s177 = smul.addr %s176, 64
          %s178 = scalar_lea.vmem [#allocation4], %s177
          %s179 = smul.u32 4, %s24
          %181 = vsyncadd %s175, 0
          %s182 = smul.addr %s179, 2
          %s183 = smul.addr %s23, 8
          %s184 = sadd.s32 %s182, %s183
          %s185 = smul.addr %s184, 8
          %s186 = scalar_lea.hbm %s0, %s185
          %s187 = sshll.u32 %s186, 4
          %s188 = int_to_ptr.hbm [resolvable:$true] %s187
          %s189 = sshll.u32 %s178, 4
          %s190 = int_to_ptr.vmem [resolvable:$true] %s189
          %195 = dma.hbm_to_vmem [thread:$0]  %s188, 1024, %s190, %s175, 128, 128, 8
        $region28: #{tpu_custom_call.1} parent=23 // pred_fallthru
          _
      $region24: #{tpu_custom_call.1} parent=5 // pred_fallthru
        _
      %p196 = scmp.le.s32.totalorder 1, %s16
      %p197 = scmp.lt.s32.totalorder %s16, 3
      %p198 = pnand %p196, %p197
      %p199 = pneg %p198
      // Predicated region
      $region29: #{tpu_custom_call.1} parent=5 // pred_check
        _
      $region30: #{tpu_custom_call.1} parent=5 // pred_check_branch
        %201 = sbr.rel (%p198) target = $region32
      $region31: #{tpu_custom_call.1} parent=5 // pred_region
        %s202 = ssub.s32 %s16, 1
        %s203 = sand.u32 %s43, 1
        %s204 = scalar_lea.sflag [#allocation5], %s203
        %s205 = sand.u32 %s43, 1
        %s206 = smul.addr %s205, 64
        %s207 = scalar_lea.vmem [#allocation4], %s206
        // Predicated region
        $region33: #{tpu_custom_call.1} parent=31 // pred_check
          %p208 = pneg %p56
        $region34: #{tpu_custom_call.1} parent=31 // pred_check_branch
          %210 = sbr.rel (%p208) target = $region36
        $region35: #{tpu_custom_call.1} parent=31 // pred_region
          %212 = dma.done %s204, 1024
        $region36: #{tpu_custom_call.1} parent=31 // pred_fallthru
          _
        // Predicated region
        $region37: #{tpu_custom_call.1} parent=31 // pred_check
          %p213 = pneg %p77
        $region38: #{tpu_custom_call.1} parent=31 // pred_check_branch
          %215 = sbr.rel (%p213) target = $region40
        $region39: #{tpu_custom_call.1} parent=31 // pred_region
          %217 = dma.done [#allocation8], 3584
        $region40: #{tpu_custom_call.1} parent=31 // pred_fallthru
          _
        // Predicated region
        $region41: #{tpu_custom_call.1} parent=31 // pred_check
          %p218 = pneg %p98
        $region42: #{tpu_custom_call.1} parent=31 // pred_check_branch
          %220 = sbr.rel (%p218) target = $region44
        $region43: #{tpu_custom_call.1} parent=31 // pred_region
          %222 = dma.done [#allocation8], 1792
        $region44: #{tpu_custom_call.1} parent=31 // pred_fallthru
          _
        %s223 = sand.u32 %s43, 1
        %s224 = scalar_lea.sflag [#allocation5], %s223
        %s225 = sand.u32 %s43, 1
        %s226 = smul.addr %s225, 64
        %s227 = scalar_lea.vmem [#allocation4], %s226
        %p228 = pneg %p56
        %p229 = pneg %p53
        %p230 = pneg %p77
        %p231 = pneg %p74
        %p232 = pneg %p98
        %p233 = pneg %p95
        %p234 = pneg %p124
        %p235 = pneg %p121
        %s236 = sand.u32 %s111, 1
        %s237 = scalar_lea.sflag [#allocation6], %s236
        %s238 = sand.u32 %s111, 1
        %s239 = smul.addr %s238, 16
        %s240 = scalar_lea.vmem [#allocation10], %s239
        %s241 = smul.u32 4, %s26
        %v242 = vld [vmem:[%s207] sm:$0xff]
        %v243 = vld [vmem:[%s207 + $0x8] sm:$0xff]
        %v244 = vld [vmem:[%s207 + $0x10] sm:$0xff]
        %v245 = vld [vmem:[%s207 + $0x18] sm:$0xff]
        %v246 = vld [vmem:[%s207 + $0x20] sm:$0xff]
        %v247 = vld [vmem:[%s207 + $0x28] sm:$0xff]
        %v248 = vld [vmem:[%s207 + $0x30] sm:$0xff]
        %v249 = vld [vmem:[%s207 + $0x38] sm:$0xff]
        %vm250 = vcmask 130048
        %v251 = vsel %vm250, %v242, 0.0
        %v252 = vsel %vm250, %v244, 0.0
        %v253 = vadd.f32 %v251, %v252
        %v254 = vsel %vm250, %v246, 0.0
        %v255 = vadd.f32 %v253, %v254
        %v256 = vsel %vm250, %v248, 0.0
        %v257 = vadd.f32 %v255, %v256
        %v258 = vsel %vm250, %v243, 0.0
        %v259 = vsel %vm250, %v245, 0.0
        %v260 = vadd.f32 %v258, %v259
        %v261 = vsel %vm250, %v247, 0.0
        %v262 = vadd.f32 %v260, %v261
        %v263 = vsel %vm250, %v249, 0.0
        %v264 = vadd.f32 %v262, %v263
        %v265 = vsel %vm250, %v242, -inf
        %v266 = vsel %vm250, %v244, -inf
        %v267 = vsel %vm250, %v246, -inf
        %v268 = vmax.f32 %v265, %v267
        %v269 = vsel %vm250, %v248, -inf
        %v270 = vmax.f32 %v266, %v269
        %v271 = vmax.f32 %v268, %v270
        %v272 = vsel %vm250, %v243, -inf
        %v273 = vsel %vm250, %v245, -inf
        %v274 = vsel %vm250, %v247, -inf
        %v275 = vmax.f32 %v272, %v274
        %v276 = vsel %vm250, %v249, -inf
        %v277 = vmax.f32 %v273, %v276
        %v278 = vmax.f32 %v275, %v277
        %p279 = scmp.eq.s32.totalorder %s26, 0
        // Predicated region
        $region45: #{tpu_custom_call.1} parent=31 // pred_check
          %p280 = pneg %p279
        $region46: #{tpu_custom_call.1} parent=31 // pred_check_branch
          %282 = sbr.rel (%p280) target = $region48
        $region47: #{tpu_custom_call.1} parent=31 // pred_region
          %283 = vst.msk [vmem:[#allocation2] sm:$0xff] %vm250, %v257
          %284 = vst.msk [vmem:[#allocation2 + $0x8] sm:$0xff] %vm250, %v264
          %285 = vst.msk [vmem:[#allocation3] sm:$0xff] %vm250, %v271
          %286 = vst.msk [vmem:[#allocation3 + $0x8] sm:$0xff] %vm250, %v278
        $region48: #{tpu_custom_call.1} parent=31 // pred_fallthru
          _
        %p287 = scmp.gt.s32.totalorder %s26, 0
        // Predicated region
        $region49: #{tpu_custom_call.1} parent=31 // pred_check
          %p288 = pneg %p287
        $region50: #{tpu_custom_call.1} parent=31 // pred_check_branch
          %290 = sbr.rel (%p288) target = $region52
        $region51: #{tpu_custom_call.1} parent=31 // pred_region
          %v291 = vld [vmem:[#allocation2] sm:$0xff]
          %v292 = vld [vmem:[#allocation2 + $0x8] sm:$0xff]
          %v293 = vadd.f32 %v291, %v257
          %v294 = vadd.f32 %v292, %v264
          %295 = vst.msk [vmem:[#allocation2] sm:$0xff] %vm250, %v293
          %296 = vst.msk [vmem:[#allocation2 + $0x8] sm:$0xff] %vm250, %v294
          %v297 = vld [vmem:[#allocation3] sm:$0xff]
          %v298 = vld [vmem:[#allocation3 + $0x8] sm:$0xff]
          %v299 = vmax.f32 %v297, %v271
          %v300 = vmax.f32 %v298, %v278
          %301 = vst.msk [vmem:[#allocation3] sm:$0xff] %vm250, %v299
          %302 = vst.msk [vmem:[#allocation3 + $0x8] sm:$0xff] %vm250, %v300
        $region52: #{tpu_custom_call.1} parent=31 // pred_fallthru
          _
        // Predicated region
        $region53: #{tpu_custom_call.1} parent=31 // pred_check
          %p303 = pneg %p279
        $region54: #{tpu_custom_call.1} parent=31 // pred_check_branch
          %305 = sbr.rel (%p303) target = $region56
        $region55: #{tpu_custom_call.1} parent=31 // pred_region
          %v306 = vld [vmem:[#allocation2] sm:$0xff]
          %v307 = vld [vmem:[#allocation2 + $0x8] sm:$0xff]
          %v308 = vmul.f32 %v306, 0.25
          %v309 = vmul.f32 %v307, 0.25
          %v310 = vld [vmem:[#allocation3] sm:$0xff]
          %v311 = vld [vmem:[#allocation3 + $0x8] sm:$0xff]
          %v312 = vld [vmem:[#allocation7] sm:$0xff]
          %v313 = vld [vmem:[#allocation7 + $0x8] sm:$0xff]
          %s314 = scalar_lea.vmem [#allocation7], 112
          %v315 = vld [vmem:[%s314] sm:$0xff]
          %v316 = vld [vmem:[%s314 + $0x8] sm:$0xff]
          %v318 = vsel %vm250, %v310, 0
          %v321 = vsel %vm250, %v311, 0
          %323 = vmatpush.msra.mxu0 0.0
          %324 = vmatpush.msra.mxu0 0.0
          %325 = vmatpush.msra.mxu0 0.0
          %326 = vmatpush.msra.mxu0 0.0
          %327 = vmatpush.msra.mxu0 0.0
          %328 = vmatpush.msra.mxu0 0.0
          %329 = vmatpush.msra.mxu0 0.0
          %330 = vmatpush.msra.mxu0 0.0
          %331 = vmatpush.msra.mxu0 0.0
          %332 = vmatpush.msra.mxu0 0.0
          %333 = vmatpush.msra.mxu0 0.0
          %334 = vmatpush.msra.mxu0 0.0
          %335 = vmatpush.msra.mxu0 0.0
          %336 = vmatpush.msra.mxu0 0.0
          %337 = vmatpush.msra.mxu0 %v316
          %338 = vmatpush.msra.mxu0 %v315
          %339 = vmatmul.f32.gmra.mxu0 %v318
          %v340 = vpop.f32.mrf.mxu0
          %v341 = vadd.f32 0.0, %v340
          %342 = vmatmul.f32.gmra.mxu0 %v321
          %v343 = vpop.f32.mrf.mxu0
          %v344 = vadd.f32 0.0, %v343
          %345 = vdwg.mxu0
          %v347 = vsel %vm250, %v308, 0
          %v350 = vsel %vm250, %v309, 0
          %352 = vmatpush.msra.mxu0 0.0
          %353 = vmatpush.msra.mxu0 0.0
          %354 = vmatpush.msra.mxu0 0.0
          %355 = vmatpush.msra.mxu0 0.0
          %356 = vmatpush.msra.mxu0 0.0
          %357 = vmatpush.msra.mxu0 0.0
          %358 = vmatpush.msra.mxu0 0.0
          %359 = vmatpush.msra.mxu0 0.0
          %360 = vmatpush.msra.mxu0 0.0
          %361 = vmatpush.msra.mxu0 0.0
          %362 = vmatpush.msra.mxu0 0.0
          %363 = vmatpush.msra.mxu0 0.0
          %364 = vmatpush.msra.mxu0 0.0
          %365 = vmatpush.msra.mxu0 0.0
          %366 = vmatpush.msra.mxu0 %v313
          %367 = vmatpush.msra.mxu0 %v312
          %368 = vmatmul.f32.gmra.mxu0 %v347
          %v369 = vpop.f32.mrf.mxu0
          %v370 = vadd.f32 %v341, %v369
          %371 = vmatmul.f32.gmra.mxu0 %v350
          %v372 = vpop.f32.mrf.mxu0
          %v373 = vadd.f32 %v344, %v372
          %374 = vdwg.mxu0
          %v375 = vld [vmem:[#allocation9] sm:$0xff]
          %v376 = vld [vmem:[#allocation9 + $0x8] sm:$0xff]
          %s377 = scalar_lea.vmem [#allocation7], 16
          %v378 = vld [vmem:[%s377] sm:$0xff]
          %v379 = vld [vmem:[%s377 + $0x8] sm:$0xff]
          %s380 = scalar_lea.vmem [#allocation7], 128
          %v381 = vld [vmem:[%s380] sm:$0xff]
          %v382 = vld [vmem:[%s380 + $0x8] sm:$0xff]
          %383 = vmatpush.msra.mxu0 0.0
          %384 = vmatpush.msra.mxu0 0.0
          %385 = vmatpush.msra.mxu0 0.0
          %386 = vmatpush.msra.mxu0 0.0
          %387 = vmatpush.msra.mxu0 0.0
          %388 = vmatpush.msra.mxu0 0.0
          %389 = vmatpush.msra.mxu0 0.0
          %390 = vmatpush.msra.mxu0 0.0
          %391 = vmatpush.msra.mxu0 0.0
          %392 = vmatpush.msra.mxu0 0.0
          %393 = vmatpush.msra.mxu0 0.0
          %394 = vmatpush.msra.mxu0 0.0
          %395 = vmatpush.msra.mxu0 0.0
          %396 = vmatpush.msra.mxu0 0.0
          %397 = vmatpush.msra.mxu0 %v382
          %398 = vmatpush.msra.mxu0 %v381
          %399 = vmatmul.f32.gmra.mxu0 %v318
          %v400 = vpop.f32.mrf.mxu0
          %v401 = vadd.f32 0.0, %v400
          %402 = vmatmul.f32.gmra.mxu0 %v321
          %v403 = vpop.f32.mrf.mxu0
          %v404 = vadd.f32 0.0, %v403
          %405 = vdwg.mxu0
          %406 = vmatpush.msra.mxu0 0.0
          %407 = vmatpush.msra.mxu0 0.0
          %408 = vmatpush.msra.mxu0 0.0
          %409 = vmatpush.msra.mxu0 0.0
          %410 = vmatpush.msra.mxu0 0.0
          %411 = vmatpush.msra.mxu0 0.0
          %412 = vmatpush.msra.mxu0 0.0
          %413 = vmatpush.msra.mxu0 0.0
          %414 = vmatpush.msra.mxu0 0.0
          %415 = vmatpush.msra.mxu0 0.0
          %416 = vmatpush.msra.mxu0 0.0
          %417 = vmatpush.msra.mxu0 0.0
          %418 = vmatpush.msra.mxu0 0.0
          %419 = vmatpush.msra.mxu0 0.0
          %420 = vmatpush.msra.mxu0 %v379
          %421 = vmatpush.msra.mxu0 %v378
          %422 = vmatmul.f32.gmra.mxu0 %v347
          %v423 = vpop.f32.mrf.mxu0
          %v424 = vadd.f32 %v401, %v423
          %425 = vmatmul.f32.gmra.mxu0 %v350
          %v426 = vpop.f32.mrf.mxu0
          %v427 = vadd.f32 %v404, %v426
          %428 = vdwg.mxu0
          %s429 = scalar_lea.vmem [#allocation9], 16
          %v430 = vld [vmem:[%s429] sm:$0xff]
          %v431 = vld [vmem:[%s429 + $0x8] sm:$0xff]
          %v433 = vsel %vm250, %v430, 0
          %v436 = vsel %vm250, %v431, 0
          %438 = vmatpush.msra.mxu0 0.0
          %439 = vmatpush.msra.mxu0 0.0
          %440 = vmatpush.msra.mxu0 0.0
          %441 = vmatpush.msra.mxu0 0.0
          %442 = vmatpush.msra.mxu0 0.0
          %443 = vmatpush.msra.mxu0 0.0
          %444 = vmatpush.msra.mxu0 0.0
          %445 = vmatpush.msra.mxu0 0.0
          %446 = vmatpush.msra.mxu0 0.0
          %447 = vmatpush.msra.mxu0 0.0
          %448 = vmatpush.msra.mxu0 0.0
          %449 = vmatpush.msra.mxu0 0.0
          %450 = vmatpush.msra.mxu0 0.0
          %451 = vmatpush.msra.mxu0 0.0
          %452 = vmatpush.msra.mxu0 %v427
          %453 = vmatpush.msra.mxu0 %v424
          %454 = vmatmul.f32.gmra.mxu0 %v433
          %v455 = vpop.f32.mrf.mxu0
          %v456 = vadd.f32 0.0, %v455
          %457 = vmatmul.f32.gmra.mxu0 %v436
          %v458 = vpop.f32.mrf.mxu0
          %v459 = vadd.f32 0.0, %v458
          %460 = vdwg.mxu0
          %v462 = vsel %vm250, %v375, 0
          %v465 = vsel %vm250, %v376, 0
          %467 = vmatpush.msra.mxu0 0.0
          %468 = vmatpush.msra.mxu0 0.0
          %469 = vmatpush.msra.mxu0 0.0
          %470 = vmatpush.msra.mxu0 0.0
          %471 = vmatpush.msra.mxu0 0.0
          %472 = vmatpush.msra.mxu0 0.0
          %473 = vmatpush.msra.mxu0 0.0
          %474 = vmatpush.msra.mxu0 0.0
          %475 = vmatpush.msra.mxu0 0.0
          %476 = vmatpush.msra.mxu0 0.0
          %477 = vmatpush.msra.mxu0 0.0
          %478 = vmatpush.msra.mxu0 0.0
          %479 = vmatpush.msra.mxu0 0.0
          %480 = vmatpush.msra.mxu0 0.0
          %481 = vmatpush.msra.mxu0 %v373
          %482 = vmatpush.msra.mxu0 %v370
          %483 = vmatmul.f32.gmra.mxu0 %v462
          %v484 = vpop.f32.mrf.mxu0
          %v485 = vadd.f32 %v456, %v484
          %486 = vmatmul.f32.gmra.mxu0 %v465
          %v487 = vpop.f32.mrf.mxu0
          %v488 = vadd.f32 %v459, %v487
          %489 = vdwg.mxu0
          %s490 = scalar_lea.vmem [#allocation7], 32
          %v491 = vld [vmem:[%s490] sm:$0xff]
          %v492 = vld [vmem:[%s490 + $0x8] sm:$0xff]
          %s493 = scalar_lea.vmem [#allocation7], 144
          %v494 = vld [vmem:[%s493] sm:$0xff]
          %v495 = vld [vmem:[%s493 + $0x8] sm:$0xff]
          %496 = vmatpush.msra.mxu0 0.0
          %497 = vmatpush.msra.mxu0 0.0
          %498 = vmatpush.msra.mxu0 0.0
          %499 = vmatpush.msra.mxu0 0.0
          %500 = vmatpush.msra.mxu0 0.0
          %501 = vmatpush.msra.mxu0 0.0
          %502 = vmatpush.msra.mxu0 0.0
          %503 = vmatpush.msra.mxu0 0.0
          %504 = vmatpush.msra.mxu0 0.0
          %505 = vmatpush.msra.mxu0 0.0
          %506 = vmatpush.msra.mxu0 0.0
          %507 = vmatpush.msra.mxu0 0.0
          %508 = vmatpush.msra.mxu0 0.0
          %509 = vmatpush.msra.mxu0 0.0
          %510 = vmatpush.msra.mxu0 %v495
          %511 = vmatpush.msra.mxu0 %v494
          %512 = vmatmul.f32.gmra.mxu0 %v318
          %v513 = vpop.f32.mrf.mxu0
          %v514 = vadd.f32 0.0, %v513
          %515 = vmatmul.f32.gmra.mxu0 %v321
          %v516 = vpop.f32.mrf.mxu0
          %v517 = vadd.f32 0.0, %v516
          %518 = vdwg.mxu0
          %519 = vmatpush.msra.mxu0 0.0
          %520 = vmatpush.msra.mxu0 0.0
          %521 = vmatpush.msra.mxu0 0.0
          %522 = vmatpush.msra.mxu0 0.0
          %523 = vmatpush.msra.mxu0 0.0
          %524 = vmatpush.msra.mxu0 0.0
          %525 = vmatpush.msra.mxu0 0.0
          %526 = vmatpush.msra.mxu0 0.0
          %527 = vmatpush.msra.mxu0 0.0
          %528 = vmatpush.msra.mxu0 0.0
          %529 = vmatpush.msra.mxu0 0.0
          %530 = vmatpush.msra.mxu0 0.0
          %531 = vmatpush.msra.mxu0 0.0
          %532 = vmatpush.msra.mxu0 0.0
          %533 = vmatpush.msra.mxu0 %v492
          %534 = vmatpush.msra.mxu0 %v491
          %535 = vmatmul.f32.gmra.mxu0 %v347
          %v536 = vpop.f32.mrf.mxu0
          %v537 = vadd.f32 %v514, %v536
          %538 = vmatmul.f32.gmra.mxu0 %v350
          %v539 = vpop.f32.mrf.mxu0
          %v540 = vadd.f32 %v517, %v539
          %541 = vdwg.mxu0
          %s542 = scalar_lea.vmem [#allocation9], 32
          %v543 = vld [vmem:[%s542] sm:$0xff]
          %v544 = vld [vmem:[%s542 + $0x8] sm:$0xff]
          %v546 = vsel %vm250, %v543, 0
          %v549 = vsel %vm250, %v544, 0
          %551 = vmatpush.msra.mxu0 0.0
          %552 = vmatpush.msra.mxu0 0.0
          %553 = vmatpush.msra.mxu0 0.0
          %554 = vmatpush.msra.mxu0 0.0
          %555 = vmatpush.msra.mxu0 0.0
          %556 = vmatpush.msra.mxu0 0.0
          %557 = vmatpush.msra.mxu0 0.0
          %558 = vmatpush.msra.mxu0 0.0
          %559 = vmatpush.msra.mxu0 0.0
          %560 = vmatpush.msra.mxu0 0.0
          %561 = vmatpush.msra.mxu0 0.0
          %562 = vmatpush.msra.mxu0 0.0
          %563 = vmatpush.msra.mxu0 0.0
          %564 = vmatpush.msra.mxu0 0.0
          %565 = vmatpush.msra.mxu0 %v540
          %566 = vmatpush.msra.mxu0 %v537
          %567 = vmatmul.f32.gmra.mxu0 %v546
          %v568 = vpop.f32.mrf.mxu0
          %v569 = vadd.f32 0.0, %v568
          %570 = vmatmul.f32.gmra.mxu0 %v549
          %v571 = vpop.f32.mrf.mxu0
          %v572 = vadd.f32 0.0, %v571
          %573 = vdwg.mxu0
          %v574 = vadd.f32 %v485, %v569
          %v575 = vadd.f32 %v488, %v572
          %s576 = scalar_lea.vmem [#allocation7], 48
          %v577 = vld [vmem:[%s576] sm:$0xff]
          %v578 = vld [vmem:[%s576 + $0x8] sm:$0xff]
          %s579 = scalar_lea.vmem [#allocation7], 160
          %v580 = vld [vmem:[%s579] sm:$0xff]
          %v581 = vld [vmem:[%s579 + $0x8] sm:$0xff]
          %582 = vmatpush.msra.mxu0 0.0
          %583 = vmatpush.msra.mxu0 0.0
          %584 = vmatpush.msra.mxu0 0.0
          %585 = vmatpush.msra.mxu0 0.0
          %586 = vmatpush.msra.mxu0 0.0
          %587 = vmatpush.msra.mxu0 0.0
          %588 = vmatpush.msra.mxu0 0.0
          %589 = vmatpush.msra.mxu0 0.0
          %590 = vmatpush.msra.mxu0 0.0
          %591 = vmatpush.msra.mxu0 0.0
          %592 = vmatpush.msra.mxu0 0.0
          %593 = vmatpush.msra.mxu0 0.0
          %594 = vmatpush.msra.mxu0 0.0
          %595 = vmatpush.msra.mxu0 0.0
          %596 = vmatpush.msra.mxu0 %v581
          %597 = vmatpush.msra.mxu0 %v580
          %598 = vmatmul.f32.gmra.mxu0 %v318
          %v599 = vpop.f32.mrf.mxu0
          %v600 = vadd.f32 0.0, %v599
          %601 = vmatmul.f32.gmra.mxu0 %v321
          %v602 = vpop.f32.mrf.mxu0
          %v603 = vadd.f32 0.0, %v602
          %604 = vdwg.mxu0
          %605 = vmatpush.msra.mxu0 0.0
          %606 = vmatpush.msra.mxu0 0.0
          %607 = vmatpush.msra.mxu0 0.0
          %608 = vmatpush.msra.mxu0 0.0
          %609 = vmatpush.msra.mxu0 0.0
          %610 = vmatpush.msra.mxu0 0.0
          %611 = vmatpush.msra.mxu0 0.0
          %612 = vmatpush.msra.mxu0 0.0
          %613 = vmatpush.msra.mxu0 0.0
          %614 = vmatpush.msra.mxu0 0.0
          %615 = vmatpush.msra.mxu0 0.0
          %616 = vmatpush.msra.mxu0 0.0
          %617 = vmatpush.msra.mxu0 0.0
          %618 = vmatpush.msra.mxu0 0.0
          %619 = vmatpush.msra.mxu0 %v578
          %620 = vmatpush.msra.mxu0 %v577
          %621 = vmatmul.f32.gmra.mxu0 %v347
          %v622 = vpop.f32.mrf.mxu0
          %v623 = vadd.f32 %v600, %v622
          %624 = vmatmul.f32.gmra.mxu0 %v350
          %v625 = vpop.f32.mrf.mxu0
          %v626 = vadd.f32 %v603, %v625
          %627 = vdwg.mxu0
          %s628 = scalar_lea.vmem [#allocation9], 48
          %v629 = vld [vmem:[%s628] sm:$0xff]
          %v630 = vld [vmem:[%s628 + $0x8] sm:$0xff]
          %v632 = vsel %vm250, %v629, 0
          %v635 = vsel %vm250, %v630, 0
          %637 = vmatpush.msra.mxu0 0.0
          %638 = vmatpush.msra.mxu0 0.0
          %639 = vmatpush.msra.mxu0 0.0
          %640 = vmatpush.msra.mxu0 0.0
          %641 = vmatpush.msra.mxu0 0.0
          %642 = vmatpush.msra.mxu0 0.0
          %643 = vmatpush.msra.mxu0 0.0
          %644 = vmatpush.msra.mxu0 0.0
          %645 = vmatpush.msra.mxu0 0.0
          %646 = vmatpush.msra.mxu0 0.0
          %647 = vmatpush.msra.mxu0 0.0
          %648 = vmatpush.msra.mxu0 0.0
          %649 = vmatpush.msra.mxu0 0.0
          %650 = vmatpush.msra.mxu0 0.0
          %651 = vmatpush.msra.mxu0 %v626
          %652 = vmatpush.msra.mxu0 %v623
          %653 = vmatmul.f32.gmra.mxu0 %v632
          %v654 = vpop.f32.mrf.mxu0
          %v655 = vadd.f32 0.0, %v654
          %656 = vmatmul.f32.gmra.mxu0 %v635
          %v657 = vpop.f32.mrf.mxu0
          %v658 = vadd.f32 0.0, %v657
          %659 = vdwg.mxu0
          %v660 = vadd.f32 %v574, %v655
          %v661 = vadd.f32 %v575, %v658
          %s662 = scalar_lea.vmem [#allocation7], 64
          %v663 = vld [vmem:[%s662] sm:$0xff]
          %v664 = vld [vmem:[%s662 + $0x8] sm:$0xff]
          %s665 = scalar_lea.vmem [#allocation7], 176
          %v666 = vld [vmem:[%s665] sm:$0xff]
          %v667 = vld [vmem:[%s665 + $0x8] sm:$0xff]
          %668 = vmatpush.msra.mxu0 0.0
          %669 = vmatpush.msra.mxu0 0.0
          %670 = vmatpush.msra.mxu0 0.0
          %671 = vmatpush.msra.mxu0 0.0
          %672 = vmatpush.msra.mxu0 0.0
          %673 = vmatpush.msra.mxu0 0.0
          %674 = vmatpush.msra.mxu0 0.0
          %675 = vmatpush.msra.mxu0 0.0
          %676 = vmatpush.msra.mxu0 0.0
          %677 = vmatpush.msra.mxu0 0.0
          %678 = vmatpush.msra.mxu0 0.0
          %679 = vmatpush.msra.mxu0 0.0
          %680 = vmatpush.msra.mxu0 0.0
          %681 = vmatpush.msra.mxu0 0.0
          %682 = vmatpush.msra.mxu0 %v667
          %683 = vmatpush.msra.mxu0 %v666
          %684 = vmatmul.f32.gmra.mxu0 %v318
          %v685 = vpop.f32.mrf.mxu0
          %v686 = vadd.f32 0.0, %v685
          %687 = vmatmul.f32.gmra.mxu0 %v321
          %v688 = vpop.f32.mrf.mxu0
          %v689 = vadd.f32 0.0, %v688
          %690 = vdwg.mxu0
          %691 = vmatpush.msra.mxu0 0.0
          %692 = vmatpush.msra.mxu0 0.0
          %693 = vmatpush.msra.mxu0 0.0
          %694 = vmatpush.msra.mxu0 0.0
          %695 = vmatpush.msra.mxu0 0.0
          %696 = vmatpush.msra.mxu0 0.0
          %697 = vmatpush.msra.mxu0 0.0
          %698 = vmatpush.msra.mxu0 0.0
          %699 = vmatpush.msra.mxu0 0.0
          %700 = vmatpush.msra.mxu0 0.0
          %701 = vmatpush.msra.mxu0 0.0
          %702 = vmatpush.msra.mxu0 0.0
          %703 = vmatpush.msra.mxu0 0.0
          %704 = vmatpush.msra.mxu0 0.0
          %705 = vmatpush.msra.mxu0 %v664
          %706 = vmatpush.msra.mxu0 %v663
          %707 = vmatmul.f32.gmra.mxu0 %v347
          %v708 = vpop.f32.mrf.mxu0
          %v709 = vadd.f32 %v686, %v708
          %710 = vmatmul.f32.gmra.mxu0 %v350
          %v711 = vpop.f32.mrf.mxu0
          %v712 = vadd.f32 %v689, %v711
          %713 = vdwg.mxu0
          %s714 = scalar_lea.vmem [#allocation9], 64
          %v715 = vld [vmem:[%s714] sm:$0xff]
          %v716 = vld [vmem:[%s714 + $0x8] sm:$0xff]
          %v718 = vsel %vm250, %v715, 0
          %v721 = vsel %vm250, %v716, 0
          %723 = vmatpush.msra.mxu0 0.0
          %724 = vmatpush.msra.mxu0 0.0
          %725 = vmatpush.msra.mxu0 0.0
          %726 = vmatpush.msra.mxu0 0.0
          %727 = vmatpush.msra.mxu0 0.0
          %728 = vmatpush.msra.mxu0 0.0
          %729 = vmatpush.msra.mxu0 0.0
          %730 = vmatpush.msra.mxu0 0.0
          %731 = vmatpush.msra.mxu0 0.0
          %732 = vmatpush.msra.mxu0 0.0
          %733 = vmatpush.msra.mxu0 0.0
          %734 = vmatpush.msra.mxu0 0.0
          %735 = vmatpush.msra.mxu0 0.0
          %736 = vmatpush.msra.mxu0 0.0
          %737 = vmatpush.msra.mxu0 %v712
          %738 = vmatpush.msra.mxu0 %v709
          %739 = vmatmul.f32.gmra.mxu0 %v718
          %v740 = vpop.f32.mrf.mxu0
          %v741 = vadd.f32 0.0, %v740
          %742 = vmatmul.f32.gmra.mxu0 %v721
          %v743 = vpop.f32.mrf.mxu0
          %v744 = vadd.f32 0.0, %v743
          %745 = vdwg.mxu0
          %v746 = vadd.f32 %v660, %v741
          %v747 = vadd.f32 %v661, %v744
          %s748 = scalar_lea.vmem [#allocation7], 80
          %v749 = vld [vmem:[%s748] sm:$0xff]
          %v750 = vld [vmem:[%s748 + $0x8] sm:$0xff]
          %s751 = scalar_lea.vmem [#allocation7], 192
          %v752 = vld [vmem:[%s751] sm:$0xff]
          %v753 = vld [vmem:[%s751 + $0x8] sm:$0xff]
          %754 = vmatpush.msra.mxu0 0.0
          %755 = vmatpush.msra.mxu0 0.0
          %756 = vmatpush.msra.mxu0 0.0
          %757 = vmatpush.msra.mxu0 0.0
          %758 = vmatpush.msra.mxu0 0.0
          %759 = vmatpush.msra.mxu0 0.0
          %760 = vmatpush.msra.mxu0 0.0
          %761 = vmatpush.msra.mxu0 0.0
          %762 = vmatpush.msra.mxu0 0.0
          %763 = vmatpush.msra.mxu0 0.0
          %764 = vmatpush.msra.mxu0 0.0
          %765 = vmatpush.msra.mxu0 0.0
          %766 = vmatpush.msra.mxu0 0.0
          %767 = vmatpush.msra.mxu0 0.0
          %768 = vmatpush.msra.mxu0 %v753
          %769 = vmatpush.msra.mxu0 %v752
          %770 = vmatmul.f32.gmra.mxu0 %v318
          %v771 = vpop.f32.mrf.mxu0
          %v772 = vadd.f32 0.0, %v771
          %773 = vmatmul.f32.gmra.mxu0 %v321
          %v774 = vpop.f32.mrf.mxu0
          %v775 = vadd.f32 0.0, %v774
          %776 = vdwg.mxu0
          %777 = vmatpush.msra.mxu0 0.0
          %778 = vmatpush.msra.mxu0 0.0
          %779 = vmatpush.msra.mxu0 0.0
          %780 = vmatpush.msra.mxu0 0.0
          %781 = vmatpush.msra.mxu0 0.0
          %782 = vmatpush.msra.mxu0 0.0
          %783 = vmatpush.msra.mxu0 0.0
          %784 = vmatpush.msra.mxu0 0.0
          %785 = vmatpush.msra.mxu0 0.0
          %786 = vmatpush.msra.mxu0 0.0
          %787 = vmatpush.msra.mxu0 0.0
          %788 = vmatpush.msra.mxu0 0.0
          %789 = vmatpush.msra.mxu0 0.0
          %790 = vmatpush.msra.mxu0 0.0
          %791 = vmatpush.msra.mxu0 %v750
          %792 = vmatpush.msra.mxu0 %v749
          %793 = vmatmul.f32.gmra.mxu0 %v347
          %v794 = vpop.f32.mrf.mxu0
          %v795 = vadd.f32 %v772, %v794
          %796 = vmatmul.f32.gmra.mxu0 %v350
          %v797 = vpop.f32.mrf.mxu0
          %v798 = vadd.f32 %v775, %v797
          %799 = vdwg.mxu0
          %s800 = scalar_lea.vmem [#allocation9], 80
          %v801 = vld [vmem:[%s800] sm:$0xff]
          %v802 = vld [vmem:[%s800 + $0x8] sm:$0xff]
          %v804 = vsel %vm250, %v801, 0
          %v807 = vsel %vm250, %v802, 0
          %809 = vmatpush.msra.mxu0 0.0
          %810 = vmatpush.msra.mxu0 0.0
          %811 = vmatpush.msra.mxu0 0.0
          %812 = vmatpush.msra.mxu0 0.0
          %813 = vmatpush.msra.mxu0 0.0
          %814 = vmatpush.msra.mxu0 0.0
          %815 = vmatpush.msra.mxu0 0.0
          %816 = vmatpush.msra.mxu0 0.0
          %817 = vmatpush.msra.mxu0 0.0
          %818 = vmatpush.msra.mxu0 0.0
          %819 = vmatpush.msra.mxu0 0.0
          %820 = vmatpush.msra.mxu0 0.0
          %821 = vmatpush.msra.mxu0 0.0
          %822 = vmatpush.msra.mxu0 0.0
          %823 = vmatpush.msra.mxu0 %v798
          %824 = vmatpush.msra.mxu0 %v795
          %825 = vmatmul.f32.gmra.mxu0 %v804
          %v826 = vpop.f32.mrf.mxu0
          %v827 = vadd.f32 0.0, %v826
          %828 = vmatmul.f32.gmra.mxu0 %v807
          %v829 = vpop.f32.mrf.mxu0
          %v830 = vadd.f32 0.0, %v829
          %831 = vdwg.mxu0
          %v832 = vadd.f32 %v746, %v827
          %v833 = vadd.f32 %v747, %v830
          %s834 = scalar_lea.vmem [#allocation7], 96
          %v835 = vld [vmem:[%s834] sm:$0xff]
          %v836 = vld [vmem:[%s834 + $0x8] sm:$0xff]
          %s837 = scalar_lea.vmem [#allocation7], 208
          %v838 = vld [vmem:[%s837] sm:$0xff]
          %v839 = vld [vmem:[%s837 + $0x8] sm:$0xff]
          %840 = vmatpush.msra.mxu0 0.0
          %841 = vmatpush.msra.mxu0 0.0
          %842 = vmatpush.msra.mxu0 0.0
          %843 = vmatpush.msra.mxu0 0.0
          %844 = vmatpush.msra.mxu0 0.0
          %845 = vmatpush.msra.mxu0 0.0
          %846 = vmatpush.msra.mxu0 0.0
          %847 = vmatpush.msra.mxu0 0.0
          %848 = vmatpush.msra.mxu0 0.0
          %849 = vmatpush.msra.mxu0 0.0
          %850 = vmatpush.msra.mxu0 0.0
          %851 = vmatpush.msra.mxu0 0.0
          %852 = vmatpush.msra.mxu0 0.0
          %853 = vmatpush.msra.mxu0 0.0
          %854 = vmatpush.msra.mxu0 %v839
          %855 = vmatpush.msra.mxu0 %v838
          %856 = vmatmul.f32.gmra.mxu0 %v318
          %v857 = vpop.f32.mrf.mxu0
          %v858 = vadd.f32 0.0, %v857
          %859 = vmatmul.f32.gmra.mxu0 %v321
          %v860 = vpop.f32.mrf.mxu0
          %v861 = vadd.f32 0.0, %v860
          %862 = vdwg.mxu0
          %863 = vmatpush.msra.mxu0 0.0
          %864 = vmatpush.msra.mxu0 0.0
          %865 = vmatpush.msra.mxu0 0.0
          %866 = vmatpush.msra.mxu0 0.0
          %867 = vmatpush.msra.mxu0 0.0
          %868 = vmatpush.msra.mxu0 0.0
          %869 = vmatpush.msra.mxu0 0.0
          %870 = vmatpush.msra.mxu0 0.0
          %871 = vmatpush.msra.mxu0 0.0
          %872 = vmatpush.msra.mxu0 0.0
          %873 = vmatpush.msra.mxu0 0.0
          %874 = vmatpush.msra.mxu0 0.0
          %875 = vmatpush.msra.mxu0 0.0
          %876 = vmatpush.msra.mxu0 0.0
          %877 = vmatpush.msra.mxu0 %v836
          %878 = vmatpush.msra.mxu0 %v835
          %879 = vmatmul.f32.gmra.mxu0 %v347
          %v880 = vpop.f32.mrf.mxu0
          %v881 = vadd.f32 %v858, %v880
          %882 = vmatmul.f32.gmra.mxu0 %v350
          %v883 = vpop.f32.mrf.mxu0
          %v884 = vadd.f32 %v861, %v883
          %885 = vdwg.mxu0
          %s886 = scalar_lea.vmem [#allocation9], 96
          %v887 = vld [vmem:[%s886] sm:$0xff]
          %v888 = vld [vmem:[%s886 + $0x8] sm:$0xff]
          %v890 = vsel %vm250, %v887, 0
          %v893 = vsel %vm250, %v888, 0
          %895 = vmatpush.msra.mxu0 0.0
          %896 = vmatpush.msra.mxu0 0.0
          %897 = vmatpush.msra.mxu0 0.0
          %898 = vmatpush.msra.mxu0 0.0
          %899 = vmatpush.msra.mxu0 0.0
          %900 = vmatpush.msra.mxu0 0.0
          %901 = vmatpush.msra.mxu0 0.0
          %902 = vmatpush.msra.mxu0 0.0
          %903 = vmatpush.msra.mxu0 0.0
          %904 = vmatpush.msra.mxu0 0.0
          %905 = vmatpush.msra.mxu0 0.0
          %906 = vmatpush.msra.mxu0 0.0
          %907 = vmatpush.msra.mxu0 0.0
          %908 = vmatpush.msra.mxu0 0.0
          %909 = vmatpush.msra.mxu0 %v884
          %910 = vmatpush.msra.mxu0 %v881
          %911 = vmatmul.f32.gmra.mxu0 %v890
          %v912 = vpop.f32.mrf.mxu0
          %v913 = vadd.f32 0.0, %v912
          %914 = vmatmul.f32.gmra.mxu0 %v893
          %v915 = vpop.f32.mrf.mxu0
          %v916 = vadd.f32 0.0, %v915
          %917 = vdwg.mxu0
          %v918 = vadd.f32 %v832, %v913
          %v919 = vadd.f32 %v833, %v916
          %v920 = vxor.u32 %v918, 2147483648
          %v921 = vxor.u32 %v919, 2147483648
          %v922 = vmul.f32 %v920, 1.442695
          %v923 = vpow.pop %v922
          %v924 = vmul.f32 %v921, 1.442695
          %v925 = vpow.pop %v924
          %v926 = vadd.f32 %v923, 1.0
          %v927 = vadd.f32 %v925, 1.0
          %v928 = vrcp.pop %v926
          %v929 = vmul.f32 %v926, %v928
          %v930 = vsub.f32 1.0, %v929
          %v931 = vmul.f32 %v928, %v930
          %v932 = vadd.f32 %v928, %v931
          %vm933 = vweird.f32 %v926
          %vm934 = vweird.f32 %v928
          %vm935 = vmor %vm933, %vm934
          %v936 = vsel %vm935, %v928, %v932
          %v937 = vand.u32 2147483647, %v926
          %vm938 = vcmp.eq.f32.partialorder %v937, 8.507059e+37
          %v939 = vand.u32 %v926, 2147483648
          %v940 = vor.u32 1.1754944e-38, %v939
          %v941 = vsel %vm938, %v940, %v936
          %v942 = vmul.f32 1.0, %v941
          %v943 = vrcp.pop %v927
          %v944 = vmul.f32 %v927, %v943
          %v945 = vsub.f32 1.0, %v944
          %v946 = vmul.f32 %v943, %v945
          %v947 = vadd.f32 %v943, %v946
          %vm948 = vweird.f32 %v927
          %vm949 = vweird.f32 %v943
          %vm950 = vmor %vm948, %vm949
          %v951 = vsel %vm950, %v943, %v947
          %v952 = vand.u32 2147483647, %v927
          %vm953 = vcmp.eq.f32.partialorder %v952, 8.507059e+37
          %v954 = vand.u32 %v927, 2147483648
          %v955 = vor.u32 1.1754944e-38, %v954
          %v956 = vsel %vm953, %v955, %v951
          %v957 = vmul.f32 1.0, %v956
          %958 = vst.msk [vmem:[%s240] sm:$0xff] %vm250, %v942
          %959 = vst.msk [vmem:[%s240 + $0x8] sm:$0xff] %vm250, %v957
        $region56: #{tpu_custom_call.1} parent=31 // pred_fallthru
          _
        %s960 = sand.u32 %s111, 1
        %s961 = scalar_lea.sflag [#allocation6], %s960
        %s962 = sand.u32 %s111, 1
        %s963 = smul.addr %s962, 16
        %s964 = scalar_lea.vmem [#allocation10], %s963
        // Predicated region
        $region57: #{tpu_custom_call.1} parent=31 // pred_check
          %p965 = pneg %p121
        $region58: #{tpu_custom_call.1} parent=31 // pred_check_branch
          %967 = sbr.rel (%p965) target = $region60
        $region59: #{tpu_custom_call.1} parent=31 // pred_region
          %969 = vsyncadd %s961, 0
          %s970 = smul.addr %s25, 2
          %s971 = smul.addr %s970, 8
          %s972 = scalar_lea.hbm %s3, %s971
          %s973 = sshll.u32 %s964, 4
          %s974 = int_to_ptr.vmem [resolvable:$true] %s973
          %s975 = sshll.u32 %s972, 4
          %s976 = int_to_ptr.hbm [resolvable:$true] %s975
          %981 = dma.vmem_to_hbm [thread:$0]  %s974, 256, %s976, %s961, 128, 128, 8
        $region60: #{tpu_custom_call.1} parent=31 // pred_fallthru
          _
      $region32: #{tpu_custom_call.1} parent=5 // pred_fallthru
        _
      %p982 = scmp.le.s32.totalorder 2, %s16
      // Predicated region
      $region61: #{tpu_custom_call.1} parent=5 // pred_check
        %p983 = pneg %p982
      $region62: #{tpu_custom_call.1} parent=5 // pred_check_branch
        %985 = sbr.rel (%p983) target = $region64
      $region63: #{tpu_custom_call.1} parent=5 // pred_region
        %s986 = ssub.s32 %s16, 2
        // Predicated region
        $region65: #{tpu_custom_call.1} parent=63 // pred_check
          %p987 = pneg %p127
        $region66: #{tpu_custom_call.1} parent=63 // pred_check_branch
          %989 = sbr.rel (%p987) target = $region68
        $region67: #{tpu_custom_call.1} parent=63 // pred_region
          %s990 = sand.u32 %s112, 1
          %s991 = scalar_lea.sflag [#allocation6], %s990
          %s992 = sand.u32 %s112, 1
          %s993 = smul.addr %s992, 16
          %s994 = scalar_lea.vmem [#allocation10], %s993
          %996 = dma.done %s991, 256
        $region68: #{tpu_custom_call.1} parent=63 // pred_fallthru
          _
      $region64: #{tpu_custom_call.1} parent=5 // pred_fallthru
        _
    $region6: #{tpu_custom_call.1} parent=1 // loop_footer
      %s20 = sadd.s32 1, %s16
    $region7: #{tpu_custom_call.1} parent=1 // loop_footer_branch
      %15 = sbr.rel target = $region3
    $region8: #{tpu_custom_call.1} parent=1 // loop_exit
      _
    %997 = vsyncpa [#allocation5], 1
    %s998 = scalar_lea.sflag [#allocation5], 1
    %999 = vsyncpa %s998, 1
    %1000 = vsyncpa [#allocation8], 1
    %1001 = vsyncpa [#allocation6], 1
    %s1002 = scalar_lea.sflag [#allocation6], 1
    %1003 = vsyncpa %s1002, 1

</llo_original>
